<compile_context>
chip_gen: v5e
topology: v5e:2x2
jax: 0.10.0
libtpu: 0.0.40
codegen_flags: <defaults>
</compile_context>

<pallas_src>
import functools

import numpy as np
import jax
import jax.numpy as jnp
from jax.experimental import pallas as pl
from jax.experimental.pallas import tpu as pltpu

LOG_2PI = float(np.log(2.0 * np.pi))
NEG_BIG = -1.0e30        # finite "-inf" for pad-lane masking (avoids NaN via inf-inf)

# packed-parameter column layout (per batch row, 12 scalars):
#  0 gc1 = -lgamma(shape1) - shape1*log(scale1) + log(w_gamma1)
#  1 km1 = shape1 - 1
#  2 is1 = 1 / scale1
#  3 gc2, 4 km2, 5 is2                       (same, component 2)
#  6 vc1 = -(log(2*pi) + log(I0(kappa1))) + log(w_vm1)
#  7 A1  = kappa1 * cos(mu1)
#  8 B1  = kappa1 * sin(mu1)
#  9 vc2, 10 A2, 11 B2                       (same, component 2)
N_PACKED = 12
P_PAD = 128          # lane-pad the parameter table to a full vreg width
TB = 8               # batch rows per grid step (f32 sublane count)
TH_MAX = 32768       # max HW lanes per block (~12 MiB live VMEM per step)


def _movement_kernel(p_ref, d_ref, logd_ref, cth_ref, sth_ref, mask_ref,
                     mov_ref, lse_ref, m_sc, s_sc, *, inline_normalize):
    """One (TB batch rows) x (TH lanes) tile of the movement grid + running LSE."""
    j = pl.program_id(1)

    p = p_ref[...]            # [TB, P_PAD]  packed per-sample parameters
    d = d_ref[...]            # [1, TH]      distance grid (flattened, padded)
    log_d = logd_ref[...]     # [1, TH]      precomputed log(distance)
    cth = cth_ref[...]        # [1, TH]      precomputed cos(bearing grid)
    sth = sth_ref[...]        # [1, TH]      precomputed sin(bearing grid)
    mask = mask_ref[...]      # [1, TH]      0 on valid lanes, NEG_BIG on pad lanes

    def col(k):
        # [TB, 1] parameter column, broadcasts along lanes against [1, TH]
        return p[:, k:k + 1]

    # gamma log-densities with log-weights folded in:
    #   g' = log(w) - lgamma(k) - k*log(s) + (k-1)*log(d) - d/s
    g1 = col(0) + col(1) * log_d - d * col(2)
    g2 = col(3) + col(4) * log_d - d * col(5)

    # von Mises log-densities with log-weights folded in, using
    #   kappa*cos(theta - mu) = (kappa*cos(mu))*cos(theta) + (kappa*sin(mu))*sin(theta)
    v1 = col(6) + col(7) * cth + col(8) * sth
    v2 = col(9) + col(10) * cth + col(11) * sth

    # merged two-component logaddexp (single log for both mixtures)
    sg = 1.0 + jnp.exp(-jnp.abs(g1 - g2))
    sv = 1.0 + jnp.exp(-jnp.abs(v1 - v2))
    movement = (jnp.maximum(g1, g2) + jnp.maximum(v1, v2)
                + jnp.log(sg * sv) + mask)                 # [TB, TH]

    # running logsumexp over the HW axis (scratch persists across the j axis)
    @pl.when(j == 0)
    def _():
        m_sc[...] = jnp.full_like(m_sc, NEG_BIG)
        s_sc[...] = jnp.zeros_like(s_sc)

    m_new = jnp.maximum(m_sc[...], jnp.max(movement, axis=1, keepdims=True))
    s_sc[...] = (s_sc[...] * jnp.exp(m_sc[...] - m_new)
                 + jnp.sum(jnp.exp(movement - m_new), axis=1, keepdims=True))
    m_sc[...] = m_new

    lse = m_new + jnp.log(s_sc[...])                       # [TB, 1]
    lse_ref[...] = lse                                      # final j writes back

    if inline_normalize:
        # single HW tile: the whole row is resident -> normalise in place
        mov_ref[...] = movement - lse
    else:
        mov_ref[...] = movement


def _normalize_kernel(lse_ref, mov_ref, out_ref):
    """Finalize pass for the multi-tile case: subtract the per-row LSE."""
    out_ref[...] = mov_ref[...] - lse_ref[...]


def make_grids(image_dim, pixel_size):
    center = image_dim // 2
    y, x = np.indices((image_dim, image_dim))
    dist = np.sqrt((pixel_size * (x - center)) ** 2 +
                   (pixel_size * (y - center)) ** 2)
    dist[center, center] = 0.56 * pixel_size
    bear = np.arctan2(center - y, x - center)
    return dist.astype(np.float32), bear.astype(np.float32)


def build_packed_params(x, bearing):
    """Per-sample scalar transforms matching the torch forward (B x 12 scalars)."""
    x = x.astype(jnp.float32)
    bearing = bearing.astype(jnp.float32)

    shape1 = jnp.exp(x[:, 0])
    log_scale1 = x[:, 1]                       # log(exp(x1)) == x1
    scale1 = jnp.exp(x[:, 1])
    shape2 = jnp.exp(x[:, 3])
    log_scale2 = x[:, 4] + jnp.log(jnp.float32(500.0))
    scale2 = jnp.exp(x[:, 4]) * 500.0
    # torch: softmax over stacked exp(x[:,2]), exp(x[:,5]) (exp THEN softmax)
    gw = jax.nn.softmax(
        jnp.stack([jnp.exp(x[:, 2]), jnp.exp(x[:, 5])], axis=0), axis=0)
    log_wg1 = jnp.log(gw[0])
    log_wg2 = jnp.log(gw[1])

    gc1 = -jax.lax.lgamma(shape1) - shape1 * log_scale1 + log_wg1
    gc2 = -jax.lax.lgamma(shape2) - shape2 * log_scale2 + log_wg2
    km1 = shape1 - 1.0
    km2 = shape2 - 1.0
    is1 = 1.0 / scale1
    is2 = 1.0 / scale2

    mu1 = x[:, 6] + bearing[:, 0]
    kappa1 = jnp.exp(x[:, 7])
    mu2 = x[:, 9] + bearing[:, 0]
    kappa2 = jnp.exp(x[:, 10])
    vw = jax.nn.softmax(
        jnp.stack([jnp.exp(x[:, 8]), jnp.exp(x[:, 11])], axis=0), axis=0)
    log_wv1 = jnp.log(vw[0])
    log_wv2 = jnp.log(vw[1])

    # numerically-safe log(I0(kappa)) = log(i0e(kappa)) + kappa
    log_i0_k1 = jnp.log(jax.scipy.special.i0e(kappa1)) + kappa1
    log_i0_k2 = jnp.log(jax.scipy.special.i0e(kappa2)) + kappa2

    vc1 = -(LOG_2PI + log_i0_k1) + log_wv1
    vc2 = -(LOG_2PI + log_i0_k2) + log_wv2
    A1 = kappa1 * jnp.cos(mu1)
    B1 = kappa1 * jnp.sin(mu1)
    A2 = kappa2 * jnp.cos(mu2)
    B2 = kappa2 * jnp.sin(mu2)

    packed = jnp.stack([gc1, km1, is1, gc2, km2, is2,
                        vc1, A1, B1, vc2, A2, B2], axis=1).astype(jnp.float32)
    assert packed.shape[1] == N_PACKED
    return packed


def params_to_grid_block(x, bearing, image_dim, pixel_size, th_max=TH_MAX):
    B = x.shape[0]
    H = W = image_dim
    HW = H * W

    # HW tiling: single tile when the grid fits, otherwise TH-lane tiles
    if HW <= th_max:
        TH = pl.cdiv(HW, 128) * 128
    else:
        TH = (th_max // 128) * 128
    HWP = pl.cdiv(HW, TH) * TH
    nhw = HWP // TH
    B_pad = pl.cdiv(B, TB) * TB
    nb = B_pad // TB

    packed = build_packed_params(x, bearing)                      # [B, 12]
    packed = jnp.pad(packed, ((0, B_pad - B), (0, P_PAD - N_PACKED)))

    # constant per-pixel grids with all per-pixel transcendentals hoisted
    dist, bear = make_grids(image_dim, pixel_size)                # [H, W]
    pad = HWP - HW
    d_flat = dist.reshape(-1)
    b_flat = bear.reshape(-1)
    d_row = jnp.asarray(
        np.pad(d_flat, (0, pad), constant_values=1.0)[None, :], jnp.float32)
    logd_row = jnp.asarray(
        np.pad(np.log(d_flat), (0, pad), constant_values=0.0)[None, :], jnp.float32)
    cth_row = jnp.asarray(
        np.pad(np.cos(b_flat), (0, pad), constant_values=1.0)[None, :], jnp.float32)
    sth_row = jnp.asarray(
        np.pad(np.sin(b_flat), (0, pad), constant_values=0.0)[None, :], jnp.float32)
    mask_row = jnp.asarray(
        np.concatenate([np.zeros((HW,), np.float32),
                        np.full((pad,), NEG_BIG, np.float32)])[None, :],
        jnp.float32)

    # scoped-VMEM estimate: double-buffered output block + 5 constant rows
    # (double-buffered) + ~6 [TB, TH] compiler temporaries, in f32 bytes
    est = 4 * TH * (2 * 2 * TB + 2 * 5 + 6 * TB)
    vmem_limit = int(min(48 * 1024 * 1024, max(32 * 1024 * 1024, 2 * est)))

    kernel = functools.partial(_movement_kernel, inline_normalize=(nhw == 1))
    const_spec = pl.BlockSpec((1, TH), lambda i, j: (0, j))
    mov, lse = pl.pallas_call(
        kernel,
        out_shape=(jax.ShapeDtypeStruct((B_pad, HWP), jnp.float32),
                   jax.ShapeDtypeStruct((B_pad, 1), jnp.float32)),
        grid=(nb, nhw),
        in_specs=[
            pl.BlockSpec((TB, P_PAD), lambda i, j: (i, 0)),   # packed params
            const_spec,                                        # distance grid
            const_spec,                                        # log(distance)
            const_spec,                                        # cos(bearing grid)
            const_spec,                                        # sin(bearing grid)
            const_spec,                                        # additive pad mask
        ],
        out_specs=(pl.BlockSpec((TB, TH), lambda i, j: (i, j)),
                   pl.BlockSpec((TB, 1), lambda i, j: (i, 0))),
        scratch_shapes=[pltpu.VMEM((TB, 1), jnp.float32),      # running max
                        pltpu.VMEM((TB, 1), jnp.float32)],     # running sum
        compiler_params=pltpu.CompilerParams(
            dimension_semantics=("parallel", "arbitrary"),
            vmem_limit_bytes=vmem_limit),
    )(packed, d_row, logd_row, cth_row, sth_row, mask_row)

    if nhw == 1:
        out = mov                      # already normalised in-kernel
    else:
        # tiny finalize pass: subtract per-row LSE, aliased in place (no extra HBM alloc)
        out = pl.pallas_call(
            _normalize_kernel,
            out_shape=jax.ShapeDtypeStruct((B_pad, HWP), jnp.float32),
            grid=(nb, nhw),
            in_specs=[pl.BlockSpec((TB, 1), lambda i, j: (i, 0)),
                      pl.BlockSpec((TB, TH), lambda i, j: (i, j))],
            out_specs=pl.BlockSpec((TB, TH), lambda i, j: (i, j)),
            input_output_aliases={1: 0},
            compiler_params=pltpu.CompilerParams(
                dimension_semantics=("parallel", "parallel"),
                vmem_limit_bytes=vmem_limit),
        )(lse, mov)

    # avoid the strided slice copy whenever padding allows
    if B_pad == B and HWP == HW:
        return out.reshape(B, H, W)
    if HWP == HW:
        return out[:B].reshape(B, H, W)        # contiguous leading-row slice only
    return out[:B, :HW].reshape(B, H, W)
    # TODO(synk): for consumers that accept it, return the padded [B, HWP]
    # layout (or bf16 output) to eliminate this copy / halve HBM writeback.


def reference_jax(x, bearing, image_dim, pixel_size):
    """Pure-JAX reference mirroring the torch forward (for validation)."""
    x = x.astype(jnp.float32)
    bearing = bearing.astype(jnp.float32)
    dist, bear = make_grids(image_dim, pixel_size)
    d = jnp.asarray(dist)[None]          # [1, H, W]
    th = jnp.asarray(bear)[None]

    def bc(v):
        return v[:, None, None]

    shape1 = bc(jnp.exp(x[:, 0]))
    scale1 = bc(jnp.exp(x[:, 1]))
    shape2 = bc(jnp.exp(x[:, 3]))
    scale2 = bc(jnp.exp(x[:, 4]) * 500.0)
    gw = jax.nn.softmax(
        jnp.stack([jnp.exp(x[:, 2]), jnp.exp(x[:, 5])], axis=0), axis=0)
    wg1, wg2 = bc(gw[0]), bc(gw[1])

    def gamma_density(xg, shape, scale):
        return (-jax.lax.lgamma(shape) - shape * jnp.log(scale)
                + (shape - 1.0) * jnp.log(xg) - xg / scale)

    g1 = gamma_density(d, shape1, scale1)
    g2 = gamma_density(d, shape2, scale2)
    m_g = jnp.maximum(g1, g2)
    gl = m_g + jnp.log(wg1 * jnp.exp(g1 - m_g) + wg2 * jnp.exp(g2 - m_g))

    mu1 = bc(x[:, 6] + bearing[:, 0])
    kappa1 = bc(jnp.exp(x[:, 7]))
    mu2 = bc(x[:, 9] + bearing[:, 0])
    kappa2 = bc(jnp.exp(x[:, 10]))
    vw = jax.nn.softmax(
        jnp.stack([jnp.exp(x[:, 8]), jnp.exp(x[:, 11])], axis=0), axis=0)
    wv1, wv2 = bc(vw[0]), bc(vw[1])

    def vm_density(tg, kappa, mu):
        return kappa * jnp.cos(tg - mu) - (
            LOG_2PI + jnp.log(jax.scipy.special.i0e(kappa)) + kappa)

    v1 = vm_density(th, kappa1, mu1)
    v2 = vm_density(th, kappa2, mu2)
    m_v = jnp.maximum(v1, v2)
    vl = m_v + jnp.log(wv1 * jnp.exp(v1 - m_v) + wv2 * jnp.exp(v2 - m_v))

    mg = gl + vl
    return mg - jax.scipy.special.logsumexp(mg, axis=(1, 2), keepdims=True)


if __name__ == "__main__":
    batch_size = 2
    image_dim = 16
    pixel_size = 25.0

    key = jax.random.PRNGKey(0)
    kx, kb = jax.random.split(key)
    # x: [B, 12] raw parameters (as produced by the upstream FC block)
    x = 0.5 * jax.random.normal(kx, (batch_size, 12), dtype=jnp.float32)
    # bearing: [B, 1] previous bearing in radians
    bearing = jax.random.uniform(kb, (batch_size, 1), dtype=jnp.float32,
                                 minval=-np.pi, maxval=np.pi)

    fn = jax.jit(params_to_grid_block,
                 static_argnames=("image_dim", "pixel_size", "th_max"))

    ref = jax.block_until_ready(reference_jax(x, bearing, image_dim, pixel_size))

    # 1) single-HW-tile path (in-kernel normalisation, no finalize pass)
    out = jax.block_until_ready(
        fn(x, bearing, image_dim=image_dim, pixel_size=pixel_size))
    assert out.shape == (batch_size, image_dim, image_dim)
    assert np.allclose(np.asarray(out), np.asarray(ref), rtol=1e-3, atol=1e-3), (
        "Pallas output (single-tile path) does not match JAX reference")
    assert np.allclose(np.exp(np.asarray(out)).sum(axis=(1, 2)), 1.0, atol=1e-3)

    # 2) multi-HW-tile path (running LSE + aliased finalize pass), exercised at
    #    small shapes by shrinking the tile width
    out_tiled = jax.block_until_ready(
        fn(x, bearing, image_dim=image_dim, pixel_size=pixel_size, th_max=128))
    assert np.allclose(np.asarray(out_tiled), np.asarray(ref),
                       rtol=1e-3, atol=1e-3), (
        "Pallas output (tiled path) does not match JAX reference")
    assert np.allclose(np.exp(np.asarray(out_tiled)).sum(axis=(1, 2)), 1.0,
                       atol=1e-3)

    print("KERNEL_OK")
</pallas_src>

<mosaic_0001>
module attributes {stable_mosaic.version = 11 : i64} {
  func.func @_movement_kernel(%arg0: i32, %arg1: i32, %arg2: memref<8x128xf32, #tpu.memory_space<vmem>>, %arg3: memref<1x256xf32, #tpu.memory_space<vmem>>, %arg4: memref<1x256xf32, #tpu.memory_space<vmem>>, %arg5: memref<1x256xf32, #tpu.memory_space<vmem>>, %arg6: memref<1x256xf32, #tpu.memory_space<vmem>>, %arg7: memref<1x256xf32, #tpu.memory_space<vmem>>, %arg8: memref<8x256xf32, #tpu.memory_space<vmem>>, %arg9: memref<8x1xf32, #tpu.memory_space<vmem>>, %arg10: memref<8x1xf32, #tpu.memory_space<vmem>>, %arg11: memref<8x1xf32, #tpu.memory_space<vmem>>) attributes {dimension_semantics = [#tpu.dimension_semantics<parallel>, #tpu.dimension_semantics<arbitrary>], iteration_bounds = array<i64: 1, 1>, scalar_prefetch = 0 : i64, scratch_operands = 2 : i64, tpu.core_type = #tpu.core_type<tc>, window_params = [{transform_indices = @transform_0, window_bounds = array<i64: 8, 128>}, {transform_indices = @transform_1, window_bounds = array<i64: 1, 256>}, {transform_indices = @transform_2, window_bounds = array<i64: 1, 256>}, {transform_indices = @transform_3, window_bounds = array<i64: 1, 256>}, {transform_indices = @transform_4, window_bounds = array<i64: 1, 256>}, {transform_indices = @transform_5, window_bounds = array<i64: 1, 256>}, {transform_indices = @transform_6, window_bounds = array<i64: 8, 256>}, {transform_indices = @transform_7, window_bounds = array<i64: 8, 1>}]} {
    %c0 = arith.constant 0 : index
    %c0_0 = arith.constant 0 : index
    %0 = vector.load %arg2[%c0, %c0_0] : memref<8x128xf32, #tpu.memory_space<vmem>>, vector<8x128xf32>
    %c0_1 = arith.constant 0 : index
    %c0_2 = arith.constant 0 : index
    %1 = vector.load %arg3[%c0_1, %c0_2] : memref<1x256xf32, #tpu.memory_space<vmem>>, vector<1x256xf32>
    %c0_3 = arith.constant 0 : index
    %c0_4 = arith.constant 0 : index
    %2 = vector.load %arg4[%c0_3, %c0_4] : memref<1x256xf32, #tpu.memory_space<vmem>>, vector<1x256xf32>
    %c0_5 = arith.constant 0 : index
    %c0_6 = arith.constant 0 : index
    %3 = vector.load %arg5[%c0_5, %c0_6] : memref<1x256xf32, #tpu.memory_space<vmem>>, vector<1x256xf32>
    %c0_7 = arith.constant 0 : index
    %c0_8 = arith.constant 0 : index
    %4 = vector.load %arg6[%c0_7, %c0_8] : memref<1x256xf32, #tpu.memory_space<vmem>>, vector<1x256xf32>
    %c0_9 = arith.constant 0 : index
    %c0_10 = arith.constant 0 : index
    %5 = vector.load %arg7[%c0_9, %c0_10] : memref<1x256xf32, #tpu.memory_space<vmem>>, vector<1x256xf32>
    %6 = vector.extract_strided_slice %0 {offsets = [0, 0], sizes = [8, 1], strides = [1, 1]} : vector<8x128xf32> to vector<8x1xf32>
    %7 = vector.extract_strided_slice %0 {offsets = [0, 1], sizes = [8, 1], strides = [1, 1]} : vector<8x128xf32> to vector<8x1xf32>
    %8 = vector.broadcast %7 : vector<8x1xf32> to vector<8x256xf32>
    %9 = vector.broadcast %2 : vector<1x256xf32> to vector<8x256xf32>
    %10 = arith.mulf %8, %9 : vector<8x256xf32>
    %11 = vector.broadcast %6 : vector<8x1xf32> to vector<8x256xf32>
    %12 = arith.addf %11, %10 : vector<8x256xf32>
    %13 = vector.extract_strided_slice %0 {offsets = [0, 2], sizes = [8, 1], strides = [1, 1]} : vector<8x128xf32> to vector<8x1xf32>
    %14 = vector.broadcast %1 : vector<1x256xf32> to vector<8x256xf32>
    %15 = vector.broadcast %13 : vector<8x1xf32> to vector<8x256xf32>
    %16 = arith.mulf %14, %15 : vector<8x256xf32>
    %17 = arith.subf %12, %16 : vector<8x256xf32>
    %18 = vector.extract_strided_slice %0 {offsets = [0, 3], sizes = [8, 1], strides = [1, 1]} : vector<8x128xf32> to vector<8x1xf32>
    %19 = vector.extract_strided_slice %0 {offsets = [0, 4], sizes = [8, 1], strides = [1, 1]} : vector<8x128xf32> to vector<8x1xf32>
    %20 = vector.broadcast %19 : vector<8x1xf32> to vector<8x256xf32>
    %21 = vector.broadcast %2 : vector<1x256xf32> to vector<8x256xf32>
    %22 = arith.mulf %20, %21 : vector<8x256xf32>
    %23 = vector.broadcast %18 : vector<8x1xf32> to vector<8x256xf32>
    %24 = arith.addf %23, %22 : vector<8x256xf32>
    %25 = vector.extract_strided_slice %0 {offsets = [0, 5], sizes = [8, 1], strides = [1, 1]} : vector<8x128xf32> to vector<8x1xf32>
    %26 = vector.broadcast %1 : vector<1x256xf32> to vector<8x256xf32>
    %27 = vector.broadcast %25 : vector<8x1xf32> to vector<8x256xf32>
    %28 = arith.mulf %26, %27 : vector<8x256xf32>
    %29 = arith.subf %24, %28 : vector<8x256xf32>
    %30 = vector.extract_strided_slice %0 {offsets = [0, 6], sizes = [8, 1], strides = [1, 1]} : vector<8x128xf32> to vector<8x1xf32>
    %31 = vector.extract_strided_slice %0 {offsets = [0, 7], sizes = [8, 1], strides = [1, 1]} : vector<8x128xf32> to vector<8x1xf32>
    %32 = vector.broadcast %31 : vector<8x1xf32> to vector<8x256xf32>
    %33 = vector.broadcast %3 : vector<1x256xf32> to vector<8x256xf32>
    %34 = arith.mulf %32, %33 : vector<8x256xf32>
    %35 = vector.broadcast %30 : vector<8x1xf32> to vector<8x256xf32>
    %36 = arith.addf %35, %34 : vector<8x256xf32>
    %37 = vector.extract_strided_slice %0 {offsets = [0, 8], sizes = [8, 1], strides = [1, 1]} : vector<8x128xf32> to vector<8x1xf32>
    %38 = vector.broadcast %37 : vector<8x1xf32> to vector<8x256xf32>
    %39 = vector.broadcast %4 : vector<1x256xf32> to vector<8x256xf32>
    %40 = arith.mulf %38, %39 : vector<8x256xf32>
    %41 = arith.addf %36, %40 : vector<8x256xf32>
    %42 = vector.extract_strided_slice %0 {offsets = [0, 9], sizes = [8, 1], strides = [1, 1]} : vector<8x128xf32> to vector<8x1xf32>
    %43 = vector.extract_strided_slice %0 {offsets = [0, 10], sizes = [8, 1], strides = [1, 1]} : vector<8x128xf32> to vector<8x1xf32>
    %44 = vector.broadcast %43 : vector<8x1xf32> to vector<8x256xf32>
    %45 = vector.broadcast %3 : vector<1x256xf32> to vector<8x256xf32>
    %46 = arith.mulf %44, %45 : vector<8x256xf32>
    %47 = vector.broadcast %42 : vector<8x1xf32> to vector<8x256xf32>
    %48 = arith.addf %47, %46 : vector<8x256xf32>
    %49 = vector.extract_strided_slice %0 {offsets = [0, 11], sizes = [8, 1], strides = [1, 1]} : vector<8x128xf32> to vector<8x1xf32>
    %50 = vector.broadcast %49 : vector<8x1xf32> to vector<8x256xf32>
    %51 = vector.broadcast %4 : vector<1x256xf32> to vector<8x256xf32>
    %52 = arith.mulf %50, %51 : vector<8x256xf32>
    %53 = arith.addf %48, %52 : vector<8x256xf32>
    %54 = arith.subf %17, %29 : vector<8x256xf32>
    %55 = math.absf %54 : vector<8x256xf32>
    %cst = arith.constant 0.000000e+00 : f32
    %56 = vector.broadcast %cst : f32 to vector<8x256xf32>
    %57 = arith.subf %56, %55 : vector<8x256xf32>
    %58 = math.exp %57 : vector<8x256xf32>
    %cst_11 = arith.constant 1.000000e+00 : f32
    %59 = vector.broadcast %cst_11 : f32 to vector<8x256xf32>
    %60 = arith.addf %59, %58 : vector<8x256xf32>
    %61 = arith.subf %41, %53 : vector<8x256xf32>
    %62 = math.absf %61 : vector<8x256xf32>
    %cst_12 = arith.constant 0.000000e+00 : f32
    %63 = vector.broadcast %cst_12 : f32 to vector<8x256xf32>
    %64 = arith.subf %63, %62 : vector<8x256xf32>
    %65 = math.exp %64 : vector<8x256xf32>
    %cst_13 = arith.constant 1.000000e+00 : f32
    %66 = vector.broadcast %cst_13 : f32 to vector<8x256xf32>
    %67 = arith.addf %66, %65 : vector<8x256xf32>
    %68 = arith.maximumf %17, %29 : vector<8x256xf32>
    %69 = arith.maximumf %41, %53 : vector<8x256xf32>
    %70 = arith.addf %68, %69 : vector<8x256xf32>
    %71 = arith.mulf %60, %67 : vector<8x256xf32>
    %72 = math.log %71 : vector<8x256xf32>
    %73 = arith.addf %70, %72 : vector<8x256xf32>
    %74 = vector.broadcast %5 : vector<1x256xf32> to vector<8x256xf32>
    %75 = arith.addf %73, %74 : vector<8x256xf32>
    %c0_i32 = arith.constant 0 : i32
    %76 = arith.cmpi eq, %arg1, %c0_i32 : i32
    %77 = arith.extui %76 : i1 to i32
    %c0_i32_14 = arith.constant 0 : i32
    %78 = arith.cmpi ne, %77, %c0_i32_14 : i32
    scf.if %78 {
      %cst_33 = arith.constant -1.000000e+30 : f32
      %103 = vector.broadcast %cst_33 : f32 to vector<8x1xf32>
      %c0_34 = arith.constant 0 : index
      %c0_35 = arith.constant 0 : index
      %104 = vector.load %arg10[%c0_34, %c0_35] : memref<8x1xf32, #tpu.memory_space<vmem>>, vector<8x1xf32>
      tpu.vector_store %arg10[%c0_34, %c0_35], %103 {strides = array<i32>} : memref<8x1xf32, #tpu.memory_space<vmem>>, vector<8x1xf32>,
      %cst_36 = arith.constant 0.000000e+00 : f32
      %105 = vector.broadcast %cst_36 : f32 to vector<8x1xf32>
      %c0_37 = arith.constant 0 : index
      %c0_38 = arith.constant 0 : index
      %106 = vector.load %arg11[%c0_37, %c0_38] : memref<8x1xf32, #tpu.memory_space<vmem>>, vector<8x1xf32>
      tpu.vector_store %arg11[%c0_37, %c0_38], %105 {strides = array<i32>} : memref<8x1xf32, #tpu.memory_space<vmem>>, vector<8x1xf32>,
    } else {
    }
    %c0_15 = arith.constant 0 : index
    %c0_16 = arith.constant 0 : index
    %79 = vector.load %arg10[%c0_15, %c0_16] : memref<8x1xf32, #tpu.memory_space<vmem>>, vector<8x1xf32>
    %cst_17 = arith.constant dense<0xFF800000> : vector<8xf32>
    %80 = vector.multi_reduction <maximumf>, %75, %cst_17 [1] : vector<8x256xf32> to vector<8xf32>
    %81 = vector.shape_cast %80 : vector<8xf32> to vector<8x1xf32>
    %82 = arith.maximumf %79, %81 : vector<8x1xf32>
    %c0_18 = arith.constant 0 : index
    %c0_19 = arith.constant 0 : index
    %83 = vector.load %arg11[%c0_18, %c0_19] : memref<8x1xf32, #tpu.memory_space<vmem>>, vector<8x1xf32>
    %c0_20 = arith.constant 0 : index
    %c0_21 = arith.constant 0 : index
    %84 = vector.load %arg10[%c0_20, %c0_21] : memref<8x1xf32, #tpu.memory_space<vmem>>, vector<8x1xf32>
    %85 = arith.subf %84, %82 : vector<8x1xf32>
    %86 = math.exp %85 : vector<8x1xf32>
    %87 = arith.mulf %83, %86 : vector<8x1xf32>
    %88 = vector.broadcast %82 : vector<8x1xf32> to vector<8x256xf32>
    %89 = arith.subf %75, %88 : vector<8x256xf32>
    %90 = math.exp %89 : vector<8x256xf32>
    %cst_22 = arith.constant dense<0.000000e+00> : vector<8xf32>
    %91 = vector.multi_reduction <add>, %90, %cst_22 [1] : vector<8x256xf32> to vector<8xf32>
    %92 = vector.shape_cast %91 : vector<8xf32> to vector<8x1xf32>
    %93 = arith.addf %87, %92 : vector<8x1xf32>
    %c0_23 = arith.constant 0 : index
    %c0_24 = arith.constant 0 : index
    %94 = vector.load %arg11[%c0_23, %c0_24] : memref<8x1xf32, #tpu.memory_space<vmem>>, vector<8x1xf32>
    tpu.vector_store %arg11[%c0_23, %c0_24], %93 {strides = array<i32>} : memref<8x1xf32, #tpu.memory_space<vmem>>, vector<8x1xf32>,
    %c0_25 = arith.constant 0 : index
    %c0_26 = arith.constant 0 : index
    %95 = vector.load %arg10[%c0_25, %c0_26] : memref<8x1xf32, #tpu.memory_space<vmem>>, vector<8x1xf32>
    tpu.vector_store %arg10[%c0_25, %c0_26], %82 {strides = array<i32>} : memref<8x1xf32, #tpu.memory_space<vmem>>, vector<8x1xf32>,
    %c0_27 = arith.constant 0 : index
    %c0_28 = arith.constant 0 : index
    %96 = vector.load %arg11[%c0_27, %c0_28] : memref<8x1xf32, #tpu.memory_space<vmem>>, vector<8x1xf32>
    %97 = math.log %96 : vector<8x1xf32>
    %98 = arith.addf %82, %97 : vector<8x1xf32>
    %c0_29 = arith.constant 0 : index
    %c0_30 = arith.constant 0 : index
    %99 = vector.load %arg9[%c0_29, %c0_30] : memref<8x1xf32, #tpu.memory_space<vmem>>, vector<8x1xf32>
    tpu.vector_store %arg9[%c0_29, %c0_30], %98 {strides = array<i32>} : memref<8x1xf32, #tpu.memory_space<vmem>>, vector<8x1xf32>,
    %100 = vector.broadcast %98 : vector<8x1xf32> to vector<8x256xf32>
    %101 = arith.subf %75, %100 : vector<8x256xf32>
    %c0_31 = arith.constant 0 : index
    %c0_32 = arith.constant 0 : index
    %102 = vector.load %arg8[%c0_31, %c0_32] : memref<8x256xf32, #tpu.memory_space<vmem>>, vector<8x256xf32>
    tpu.vector_store %arg8[%c0_31, %c0_32], %101 {strides = array<i32>} : memref<8x256xf32, #tpu.memory_space<vmem>>, vector<8x256xf32>,
    return
  }
  func.func @transform_0(%arg0: i32, %arg1: i32) -> (i32, i32) {
    %c0_i32 = arith.constant 0 : i32
    %c0_i32_0 = arith.constant 0 : i32
    return %arg0, %c0_i32 : i32, i32
  }
  func.func @transform_1(%arg0: i32, %arg1: i32) -> (i32, i32) {
    %c0_i32 = arith.constant 0 : i32
    %c0_i32_0 = arith.constant 0 : i32
    return %c0_i32, %arg1 : i32, i32
  }
  func.func @transform_2(%arg0: i32, %arg1: i32) -> (i32, i32) {
    %c0_i32 = arith.constant 0 : i32
    %c0_i32_0 = arith.constant 0 : i32
    return %c0_i32, %arg1 : i32, i32
  }
  func.func @transform_3(%arg0: i32, %arg1: i32) -> (i32, i32) {
    %c0_i32 = arith.constant 0 : i32
    %c0_i32_0 = arith.constant 0 : i32
    return %c0_i32, %arg1 : i32, i32
  }
  func.func @transform_4(%arg0: i32, %arg1: i32) -> (i32, i32) {
    %c0_i32 = arith.constant 0 : i32
    %c0_i32_0 = arith.constant 0 : i32
    return %c0_i32, %arg1 : i32, i32
  }
  func.func @transform_5(%arg0: i32, %arg1: i32) -> (i32, i32) {
    %c0_i32 = arith.constant 0 : i32
    %c0_i32_0 = arith.constant 0 : i32
    return %c0_i32, %arg1 : i32, i32
  }
  func.func @transform_6(%arg0: i32, %arg1: i32) -> (i32, i32) {
    %c0_i32 = arith.constant 0 : i32
    return %arg0, %arg1 : i32, i32
  }
  func.func @transform_7(%arg0: i32, %arg1: i32) -> (i32, i32) {
    %c0_i32 = arith.constant 0 : i32
    %c0_i32_0 = arith.constant 0 : i32
    return %arg0, %c0_i32 : i32, i32
  }
}

</mosaic_0001>

<llo_original>
// kernel: params_to_grid_block.1
$region0: #{params_to_grid_block.1}
  #allocation0 [shape = 'u32[]', space=smem, size = 0x4, offset = 0x4, fixed_abs, tag = 'smem constant byte address 0x4 - core index']
  #allocation1 [shape = 'u32[72,128]{1,0:T(1,128)}', space=vmem, size = 0x9000, scoped, tag = 'internal scratch']
  #allocation2 [shape = 'f32[8,1]{1,0:T(8,128)}', space=vmem, size = 0x1000, scoped, tag = 'scratch operand']
  #allocation3 [shape = 'f32[8,1]{1,0:T(8,128)}', space=vmem, size = 0x1000, scoped, tag = 'scratch operand']
  %s0 = inlined_call_operand.vmem [shape: f32[8,128], index: 0, kind: input, shape index: {}]
  %s1 = inlined_call_operand.vmem [shape: f32[1,256], index: 1, kind: input, shape index: {}]
  %s2 = inlined_call_operand.vmem [shape: f32[1,256], index: 2, kind: input, shape index: {}]
  %s3 = inlined_call_operand.vmem [shape: f32[1,256], index: 3, kind: input, shape index: {}]
  %s4 = inlined_call_operand.vmem [shape: f32[1,256], index: 4, kind: input, shape index: {}]
  %s5 = inlined_call_operand.vmem [shape: f32[1,256], index: 5, kind: input, shape index: {}]
  %s6 = inlined_call_operand.vmem [shape: f32[8,256], index: 6, kind: output, shape index: {0}]
  %s7 = inlined_call_operand.hbm [shape: f32[8,1], index: 7, kind: output, shape index: {1}]
  %8 = xla_tuple %s6, %s7
  %s9 = sld [smem:[#allocation0]]
  $region46: #{params_to_grid_block.1} parent=0
    _
  %s11 = ssub.s32 1, %s9
  %s12 = scalar_select 0, %s11, %s9
  $region1: #{params_to_grid_block.1} parent=0
    #allocation4 [shape = 'u8[4096]{0}', space=vmem, size = 0x1000, scoped, tag = 'output window, operand 1, single buffered']
    #allocation5 [shape = 's32[1]{0}', space=sflag, size = 0x4, scoped, tag = 'scoped memory for params_to_grid_block.1']
    %13 = vsyncpa [#allocation5], 0
    // Predicated region
    $region2: #{params_to_grid_block.1} parent=1 // pred_check
      _
    $region3: #{params_to_grid_block.1} parent=1 // pred_check_branch
      %15 = sbr.rel (0) target = $region5
    $region4: #{params_to_grid_block.1} parent=1 // pred_region
      _
    $region5: #{params_to_grid_block.1} parent=1 // pred_fallthru
      _
    // Predicated region
    $region6: #{params_to_grid_block.1} parent=1 // pred_check
      _
    $region7: #{params_to_grid_block.1} parent=1 // pred_check_branch
      %17 = sbr.rel (0) target = $region9
    $region8: #{params_to_grid_block.1} parent=1 // pred_region
      _
    $region9: #{params_to_grid_block.1} parent=1 // pred_fallthru
      _
    // Predicated region
    $region10: #{params_to_grid_block.1} parent=1 // pred_check
      _
    $region11: #{params_to_grid_block.1} parent=1 // pred_check_branch
      %19 = sbr.rel (0) target = $region13
    $region12: #{params_to_grid_block.1} parent=1 // pred_region
      _
    $region13: #{params_to_grid_block.1} parent=1 // pred_fallthru
      _
    // Predicated region
    $region14: #{params_to_grid_block.1} parent=1 // pred_check
      _
    $region15: #{params_to_grid_block.1} parent=1 // pred_check_branch
      %21 = sbr.rel (0) target = $region17
    $region16: #{params_to_grid_block.1} parent=1 // pred_region
      _
    $region17: #{params_to_grid_block.1} parent=1 // pred_fallthru
      _
    // Predicated region
    $region18: #{params_to_grid_block.1} parent=1 // pred_check
      _
    $region19: #{params_to_grid_block.1} parent=1 // pred_check_branch
      %23 = sbr.rel (0) target = $region21
    $region20: #{params_to_grid_block.1} parent=1 // pred_region
      _
    $region21: #{params_to_grid_block.1} parent=1 // pred_fallthru
      _
    // Predicated region
    $region22: #{params_to_grid_block.1} parent=1 // pred_check
      _
    $region23: #{params_to_grid_block.1} parent=1 // pred_check_branch
      %25 = sbr.rel (0) target = $region25
    $region24: #{params_to_grid_block.1} parent=1 // pred_region
      _
    $region25: #{params_to_grid_block.1} parent=1 // pred_fallthru
      _
    %v26 = vld [vmem:[%s0] sm:$0xff]
    %v27 = vld [vmem:[%s1] sm:$0x3]
    %v28 = vld [vmem:[%s2] sm:$0x3]
    %v29 = vld [vmem:[%s3] sm:$0x3]
    %v30 = vld [vmem:[%s4] sm:$0x3]
    %v31 = vld [vmem:[%s5] sm:$0x3]
    %33 = vset.pattern.permute.xlu0 1
    %34 = vperm.xlu0 %33, %v26
    %v35 = vpop.permute.xlu0 %34
    %v38 = vperm.slane %v28, 0
    %v39 = vperm.slane %v28, 1
    %v42 = vmul.f32 %v35, %v38
    %v43 = vmul.f32 %v35, %v39
    %44 = vset.pattern.permute.xlu0 0
    %45 = vperm.xlu0 %44, %v26
    %v46 = vpop.permute.xlu0 %45
    %v48 = vadd.f32 %v46, %v42
    %v49 = vadd.f32 %v46, %v43
    %v51 = vperm.slane %v27, 0
    %v52 = vperm.slane %v27, 1
    %55 = vset.pattern.permute.xlu0 2
    %56 = vperm.xlu0 %55, %v26
    %v57 = vpop.permute.xlu0 %56
    %v59 = vmul.f32 %v51, %v57
    %v60 = vmul.f32 %v52, %v57
    %v61 = vsub.f32 %v48, %v59
    %v62 = vsub.f32 %v49, %v60
    %63 = vset.pattern.permute.xlu0 4
    %64 = vperm.xlu0 %63, %v26
    %v65 = vpop.permute.xlu0 %64
    %v67 = vmul.f32 %v65, %v38
    %v68 = vmul.f32 %v65, %v39
    %69 = vset.pattern.permute.xlu0 3
    %70 = vperm.xlu0 %69, %v26
    %v71 = vpop.permute.xlu0 %70
    %v73 = vadd.f32 %v71, %v67
    %v74 = vadd.f32 %v71, %v68
    %75 = vset.pattern.permute.xlu0 5
    %76 = vperm.xlu0 %75, %v26
    %v77 = vpop.permute.xlu0 %76
    %v79 = vmul.f32 %v51, %v77
    %v80 = vmul.f32 %v52, %v77
    %v81 = vsub.f32 %v73, %v79
    %v82 = vsub.f32 %v74, %v80
    %83 = vset.pattern.permute.xlu0 7
    %84 = vperm.xlu0 %83, %v26
    %v85 = vpop.permute.xlu0 %84
    %v88 = vperm.slane %v29, 0
    %v89 = vperm.slane %v29, 1
    %v92 = vmul.f32 %v85, %v88
    %v93 = vmul.f32 %v85, %v89
    %94 = vset.pattern.permute.xlu0 6
    %95 = vperm.xlu0 %94, %v26
    %v96 = vpop.permute.xlu0 %95
    %v98 = vadd.f32 %v96, %v92
    %v99 = vadd.f32 %v96, %v93
    %100 = vset.pattern.permute.xlu0 8
    %101 = vperm.xlu0 %100, %v26
    %v102 = vpop.permute.xlu0 %101
    %v105 = vperm.slane %v30, 0
    %v106 = vperm.slane %v30, 1
    %v109 = vmul.f32 %v102, %v105
    %v110 = vmul.f32 %v102, %v106
    %v111 = vadd.f32 %v98, %v109
    %v112 = vadd.f32 %v99, %v110
    %113 = vset.pattern.permute.xlu0 10
    %114 = vperm.xlu0 %113, %v26
    %v115 = vpop.permute.xlu0 %114
    %v117 = vmul.f32 %v115, %v88
    %v118 = vmul.f32 %v115, %v89
    %119 = vset.pattern.permute.xlu0 9
    %120 = vperm.xlu0 %119, %v26
    %v121 = vpop.permute.xlu0 %120
    %v123 = vadd.f32 %v121, %v117
    %v124 = vadd.f32 %v121, %v118
    %125 = vset.pattern.permute.xlu0 11
    %126 = vperm.xlu0 %125, %v26
    %v127 = vpop.permute.xlu0 %126
    %v129 = vmul.f32 %v127, %v105
    %v130 = vmul.f32 %v127, %v106
    %v131 = vadd.f32 %v123, %v129
    %v132 = vadd.f32 %v124, %v130
    %v133 = vsub.f32 %v61, %v81
    %v134 = vsub.f32 %v62, %v82
    %v135 = vand.u32 2147483647, %v133
    %v136 = vand.u32 2147483647, %v134
    %v137 = vsub.f32 0.0, %v135
    %v138 = vsub.f32 0.0, %v136
    %v139 = vmul.f32 %v137, 1.442695
    %v140 = vpow.pop %v139
    %v141 = vmul.f32 %v138, 1.442695
    %v142 = vpow.pop %v141
    %v143 = vadd.f32 %v140, 1.0
    %v144 = vadd.f32 %v142, 1.0
    %v145 = vsub.f32 %v111, %v131
    %v146 = vsub.f32 %v112, %v132
    %v147 = vand.u32 2147483647, %v145
    %v148 = vand.u32 2147483647, %v146
    %v149 = vsub.f32 0.0, %v147
    %v150 = vsub.f32 0.0, %v148
    %v151 = vmul.f32 %v149, 1.442695
    %v152 = vpow.pop %v151
    %v153 = vmul.f32 %v150, 1.442695
    %v154 = vpow.pop %v153
    %v155 = vadd.f32 %v152, 1.0
    %v156 = vadd.f32 %v154, 1.0
    %v157 = vmax.f32 %v61, %v81
    %v158 = vmax.f32 %v62, %v82
    %v159 = vmax.f32 %v111, %v131
    %v160 = vmax.f32 %v112, %v132
    %v161 = vadd.f32 %v157, %v159
    %v162 = vadd.f32 %v158, %v160
    %v163 = vmul.f32 %v143, %v155
    %v164 = vmul.f32 %v144, %v156
    %v165 = vlog2.pop %v163
    %v166 = vmul.f32 %v165, 0.6931472
    %v167 = vlog2.pop %v164
    %v168 = vmul.f32 %v167, 0.6931472
    %v169 = vadd.f32 %v161, %v166
    %v170 = vadd.f32 %v162, %v168
    %v172 = vperm.slane %v31, 0
    %v173 = vperm.slane %v31, 1
    %v176 = vadd.f32 %v169, %v172
    %v177 = vadd.f32 %v170, %v173
    %p178 = scmp.eq.s32.totalorder 0, 0
    // Predicated region
    $region26: #{params_to_grid_block.1} parent=1 // pred_check
      %p179 = pneg %p178
    $region27: #{params_to_grid_block.1} parent=1 // pred_check_branch
      %181 = sbr.rel (%p179) target = $region29
    $region28: #{params_to_grid_block.1} parent=1 // pred_region
      %vm182 = vcmask 7168
      %183 = vst.msk [vmem:[#allocation2] sm:$0xff] %vm182, -1e+30
      %184 = vst.msk [vmem:[#allocation3] sm:$0xff] %vm182, 0.0
    $region29: #{params_to_grid_block.1} parent=1 // pred_fallthru
      _
    %v185 = vld [vmem:[#allocation2] sm:$0xff]
    %v186 = vmax.f32 %v176, %v177
    %187 = vmax.xlane.f32.xlu0 %v186
    %v188 = vpop.xlane.xlu0 %187
    %v189 = vmax.f32 %v185, %v188
    %v190 = vld [vmem:[#allocation3] sm:$0xff]
    %v191 = vsub.f32 %v185, %v189
    %v192 = vmul.f32 %v191, 1.442695
    %v193 = vpow.pop %v192
    %v194 = vmul.f32 %v190, %v193
    %196 = vset.pattern.permute.xlu0 0
    %197 = vperm.xlu0 %196, %v189
    %v198 = vpop.permute.xlu0 %197
    %v200 = vsub.f32 %v176, %v198
    %v201 = vsub.f32 %v177, %v198
    %v202 = vmul.f32 %v200, 1.442695
    %v203 = vpow.pop %v202
    %v204 = vmul.f32 %v201, 1.442695
    %v205 = vpow.pop %v204
    %v206 = vadd.f32 %v203, %v205
    %207 = vadd.xlane.f32.xlu0 %v206
    %v208 = vpop.xlane.xlu0 %207
    %v209 = vadd.f32 %v194, %v208
    %vm210 = vcmask 7168
    %211 = vst.msk [vmem:[#allocation3] sm:$0xff] %vm210, %v209
    %212 = vst.msk [vmem:[#allocation2] sm:$0xff] %vm210, %v189
    %v213 = vld [vmem:[#allocation3] sm:$0xff]
    %v214 = vlog2.pop %v213
    %v215 = vmul.f32 %v214, 0.6931472
    %v216 = vadd.f32 %v189, %v215
    %217 = vst.msk [vmem:[#allocation4] sm:$0xff] %vm210, %v216
    %219 = vset.pattern.permute.xlu0 0
    %220 = vperm.xlu0 %219, %v216
    %v221 = vpop.permute.xlu0 %220
    %v223 = vsub.f32 %v176, %v221
    %v224 = vsub.f32 %v177, %v221
    %225 = vst [vmem:[%s6] sm:$0xff] %v223
    %226 = vst [vmem:[%s6 + $0x8] sm:$0xff] %v224
    // Predicated region
    $region30: #{params_to_grid_block.1} parent=1 // pred_check
      _
    $region31: #{params_to_grid_block.1} parent=1 // pred_check_branch
      %228 = sbr.rel (0) target = $region33
    $region32: #{params_to_grid_block.1} parent=1 // pred_region
      _
    $region33: #{params_to_grid_block.1} parent=1 // pred_fallthru
      _
    // Predicated region
    $region34: #{params_to_grid_block.1} parent=1 // pred_check
      _
    $region35: #{params_to_grid_block.1} parent=1 // pred_check_branch
      %230 = sbr.rel (0) target = $region37
    $region36: #{params_to_grid_block.1} parent=1 // pred_region
      %232 = vsyncadd [#allocation5], 0
      %s234 = sshll.u32 [#allocation4], 4
      %s235 = int_to_ptr.vmem [resolvable:$true] %s234
      %s236 = sshll.u32 %s7, 4
      %s237 = int_to_ptr.hbm [resolvable:$true] %s236
      %239 = dma.vmem_to_hbm [thread:$0]  %s235, 128, %s237, [#allocation5]
    $region37: #{params_to_grid_block.1} parent=1 // pred_fallthru
      _
    // Predicated region
    $region38: #{params_to_grid_block.1} parent=1 // pred_check
      _
    $region39: #{params_to_grid_block.1} parent=1 // pred_check_branch
      %241 = sbr.rel (0) target = $region41
    $region40: #{params_to_grid_block.1} parent=1 // pred_region
      _
    $region41: #{params_to_grid_block.1} parent=1 // pred_fallthru
      _
    // Predicated region
    $region42: #{params_to_grid_block.1} parent=1 // pred_check
      _
    $region43: #{params_to_grid_block.1} parent=1 // pred_check_branch
      %243 = sbr.rel (0) target = $region45
    $region44: #{params_to_grid_block.1} parent=1 // pred_region
      %245 = dma.done [#allocation5], 128
    $region45: #{params_to_grid_block.1} parent=1 // pred_fallthru
      _
    %246 = vsyncpa [#allocation5], 1

</llo_original>
